<compile_context>
chip_gen: v5e
topology: v5e:2x2
jax: 0.10.0
libtpu: 0.0.40
codegen_flags: <defaults>
</compile_context>

<pallas_src>
import jax
import jax.numpy as jnp
from jax.experimental import pallas as pl
from jax.experimental.pallas import tpu as pltpu


def _ledidi_fwd_kernel(base_ref, g_ref, o_ref):
    """One (Bt, C, Lt) tile.

    base_ref: (1,  C, Lt)  precomputed log(X + eps) + weights (broadcast over batch)
    g_ref:    (Bt, C, Lt)  per-sample Gumbel(0,1) noise tile
    o_ref:    (Bt, C, Lt)  hard one-hot output tile
    """
    # z = (log(X+eps) + weights + gumbel); dividing by tau (>0) does not change
    # the argmax, so it is skipped entirely on the hard forward path.
    z = base_ref[...] + g_ref[...]

    c = z.shape[1]
    m = jnp.max(z, axis=1, keepdims=True)
    idx = jax.lax.broadcasted_iota(jnp.int32, z.shape, 1)
    # first (lowest-index) maximal channel, matching torch.argmax tie-breaking
    first_max = jnp.min(jnp.where(z >= m, idx, c), axis=1, keepdims=True)
    o_ref[...] = (idx == first_max).astype(o_ref.dtype)


def _choose_l_tile(B, C, L, *, itemsize=4, target_block_bytes=2 << 20):
    """Largest length tile that divides L, is a multiple of 128, and keeps one
    (B, C, Lt) stream block under ~2 MiB (enough to hide per-step overhead even
    at v7x HBM bandwidth while staying far below every generation's VMEM limit)."""
    if L % 128 != 0:
        return L  # full-extent last dim is always a legal block
    best = 128
    for lt in range(128, L + 1, 128):
        if L % lt == 0 and B * C * lt * itemsize <= target_block_bytes:
            best = lt
    return best


def ledidi_forward(X, weights, gumbel, *, tau=1.0, eps=1e-4, l_tile=None):
    """X: (1, C, L), weights: (1, C, L), gumbel: (B, C, L)  (all float32).

    Returns (B, C, L) float32 batch of one-hot edited sequences.
    `tau` is accepted for API compatibility; the hard forward value is
    independent of tau (argmax is invariant under positive scaling).
    """
    del tau  # forward-hard value does not depend on tau
    B, C, L = gumbel.shape
    assert X.shape == (1, C, L) and weights.shape == (1, C, L)

    # Hoisted out of the batched hot loop: tiny (1, C, L) op done once by XLA.
    base = (jnp.log(X + eps) + weights).astype(jnp.float32)

    if l_tile is None:
        l_tile = _choose_l_tile(B, C, L)
    assert L % l_tile == 0
    assert l_tile % 128 == 0 or l_tile == L

    # Whole batch per block (Ledidi batch sizes are small: 10-64), wide length
    # tiles -> each grid step streams O(MiB), not KiB.
    grid = (1, L // l_tile)

    return pl.pallas_call(
        _ledidi_fwd_kernel,
        out_shape=jax.ShapeDtypeStruct((B, C, L), X.dtype),
        grid=grid,
        in_specs=[
            pl.BlockSpec((1, C, l_tile), lambda b, j: (0, 0, j)),  # base (broadcast over batch)
            pl.BlockSpec((B, C, l_tile), lambda b, j: (0, 0, j)),  # gumbel noise
        ],
        out_specs=pl.BlockSpec((B, C, l_tile), lambda b, j: (0, 0, j)),
        compiler_params=pltpu.CompilerParams(
            dimension_semantics=("parallel", "parallel"),
            vmem_limit_bytes=32 * 1024 * 1024,
        ),
    )(base, gumbel)


def _ledidi_forward_ref(X, weights, gumbel, *, tau=1.0, eps=1e-4):
    """Pure-JAX reference: faithful gumbel_softmax(hard=True) forward value."""
    logits = jnp.log(X + eps) + weights                 # (1, C, L)
    z = (logits + gumbel) / tau                         # (B, C, L) via broadcast
    y_soft = jax.nn.softmax(z, axis=1)
    idx = jnp.argmax(z, axis=1)                         # first max (same tie-break)
    y_hard = jax.nn.one_hot(idx, z.shape[1], axis=1, dtype=X.dtype)
    # straight-through forward value
    return y_hard - jax.lax.stop_gradient(y_soft) + y_soft


if __name__ == "__main__":
    # Small, module-consistent shapes: num_channels=4, slice_length=256, batch_size=8.
    C = 4          # num_channels
    L = 256        # slice_length (small stand-in for 2048)
    B = 8          # batch_size
    TAU = 1.0
    EPS = 1e-4

    key = jax.random.PRNGKey(0)
    k_seq, k_gumbel = jax.random.split(key)

    # One-hot input sequence X, shape (1, C, L), float32 (NCL layout).
    tokens = jax.random.randint(k_seq, (L,), 0, C)
    X = jax.nn.one_hot(tokens, C, dtype=jnp.float32).T[None]        # (1, C, L)

    # Design weights: zeros, as in Ledidi.__init__ (torch.zeros((1, C, L))).
    weights = jnp.zeros((1, C, L), dtype=jnp.float32)

    # Per-sample Gumbel(0,1) noise (PyTorch draws it inside gumbel_softmax).
    gumbel = jax.random.gumbel(k_gumbel, (B, C, L), dtype=jnp.float32)

    out = ledidi_forward(X, weights, gumbel, tau=TAU, eps=EPS)
    out = jax.block_until_ready(out)

    ref = _ledidi_forward_ref(X, weights, gumbel, tau=TAU, eps=EPS)

    assert out.shape == (B, C, L) and out.dtype == jnp.float32
    # Each position must be exactly one-hot over the channel dim.
    assert bool(jnp.all(jnp.abs(jnp.sum(out, axis=1) - 1.0) < 1e-6))
    # Matches the faithful straight-through reference (value == hard one-hot
    # up to ~1 ulp of y_soft in the reference's STE expression).
    assert bool(jnp.allclose(out, ref, atol=1e-5)), "kernel/reference mismatch"

    print("KERNEL_OK")
</pallas_src>

<mosaic_0001>
module attributes {stable_mosaic.version = 11 : i64} {
  func.func @_ledidi_fwd_kernel(%arg0: i32, %arg1: i32, %arg2: memref<1x4x256xf32, #tpu.memory_space<vmem>>, %arg3: memref<8x4x256xf32, #tpu.memory_space<vmem>>, %arg4: memref<8x4x256xf32, #tpu.memory_space<vmem>>) attributes {dimension_semantics = [#tpu.dimension_semantics<parallel>, #tpu.dimension_semantics<parallel>], iteration_bounds = array<i64: 1, 1>, scalar_prefetch = 0 : i64, scratch_operands = 0 : i64, tpu.core_type = #tpu.core_type<tc>, window_params = [{transform_indices = @transform_0, window_bounds = array<i64: 1, 4, 256>}, {transform_indices = @transform_1, window_bounds = array<i64: 8, 4, 256>}, {transform_indices = @transform_2, window_bounds = array<i64: 8, 4, 256>}]} {
    %c0 = arith.constant 0 : index
    %c0_0 = arith.constant 0 : index
    %c0_1 = arith.constant 0 : index
    %0 = vector.load %arg2[%c0, %c0_0, %c0_1] : memref<1x4x256xf32, #tpu.memory_space<vmem>>, vector<1x4x256xf32>
    %c0_2 = arith.constant 0 : index
    %c0_3 = arith.constant 0 : index
    %c0_4 = arith.constant 0 : index
    %1 = vector.load %arg3[%c0_2, %c0_3, %c0_4] : memref<8x4x256xf32, #tpu.memory_space<vmem>>, vector<8x4x256xf32>
    %2 = vector.broadcast %0 : vector<1x4x256xf32> to vector<8x4x256xf32>
    %3 = arith.addf %2, %1 : vector<8x4x256xf32>
    %cst = arith.constant dense<0xFF800000> : vector<8x256xf32>
    %4 = vector.multi_reduction <maximumf>, %3, %cst [1] : vector<8x4x256xf32> to vector<8x256xf32>
    %5 = vector.shape_cast %4 : vector<8x256xf32> to vector<8x1x256xf32>
    %6 = tpu.iota {dimensions = array<i32: 1>} : vector<8x4x256xi32>
    %7 = vector.broadcast %5 : vector<8x1x256xf32> to vector<8x4x256xf32>
    %8 = arith.cmpf oge, %3, %7 : vector<8x4x256xf32>
    %c4_i32 = arith.constant 4 : i32
    %9 = vector.broadcast %c4_i32 : i32 to vector<8x4x256xi32>
    %10 = arith.select %8, %6, %9 : vector<8x4x256xi1>, vector<8x4x256xi32>
    %cst_5 = arith.constant dense<2147483647> : vector<8x256xi32>
    %11 = vector.multi_reduction <minsi>, %10, %cst_5 [1] : vector<8x4x256xi32> to vector<8x256xi32>
    %12 = vector.shape_cast %11 : vector<8x256xi32> to vector<8x1x256xi32>
    %13 = vector.broadcast %12 : vector<8x1x256xi32> to vector<8x4x256xi32>
    %14 = arith.cmpi eq, %6, %13 : vector<8x4x256xi32>
    %15 = arith.extui %14 : vector<8x4x256xi1> to vector<8x4x256xi32>
    %16 = arith.sitofp %15 : vector<8x4x256xi32> to vector<8x4x256xf32>
    %c0_6 = arith.constant 0 : index
    %c0_7 = arith.constant 0 : index
    %c0_8 = arith.constant 0 : index
    %17 = vector.load %arg4[%c0_6, %c0_7, %c0_8] : memref<8x4x256xf32, #tpu.memory_space<vmem>>, vector<8x4x256xf32>
    tpu.vector_store %arg4[%c0_6, %c0_7, %c0_8], %16 {strides = array<i32>} : memref<8x4x256xf32, #tpu.memory_space<vmem>>, vector<8x4x256xf32>,
    return
  }
  func.func @transform_0(%arg0: i32, %arg1: i32) -> (i32, i32, i32) {
    %c0_i32 = arith.constant 0 : i32
    %c0_i32_0 = arith.constant 0 : i32
    %c0_i32_1 = arith.constant 0 : i32
    return %c0_i32, %c0_i32_0, %arg1 : i32, i32, i32
  }
  func.func @transform_1(%arg0: i32, %arg1: i32) -> (i32, i32, i32) {
    %c0_i32 = arith.constant 0 : i32
    %c0_i32_0 = arith.constant 0 : i32
    %c0_i32_1 = arith.constant 0 : i32
    return %c0_i32, %c0_i32_0, %arg1 : i32, i32, i32
  }
  func.func @transform_2(%arg0: i32, %arg1: i32) -> (i32, i32, i32) {
    %c0_i32 = arith.constant 0 : i32
    %c0_i32_0 = arith.constant 0 : i32
    %c0_i32_1 = arith.constant 0 : i32
    return %c0_i32, %c0_i32_0, %arg1 : i32, i32, i32
  }
}

</mosaic_0001>

<llo_original>
// kernel: tpu_custom_call.1
$region0: #{tpu_custom_call.1}
  #allocation0 [shape = 'u32[]', space=smem, size = 0x4, offset = 0x4, fixed_abs, tag = 'smem constant byte address 0x4 - core index']
  #allocation1 [shape = 'u32[72,128]{1,0:T(1,128)}', space=vmem, size = 0x9000, scoped, tag = 'internal scratch']
  %s0 = inlined_call_operand.hbm [shape: f32[1,4,256], index: 0, kind: input, shape index: {}]
  %s1 = inlined_call_operand.hbm [shape: f32[8,4,256], index: 1, kind: input, shape index: {}]
  %s2 = inlined_call_operand.hbm [shape: f32[8,4,256], index: 2, kind: output, shape index: {}]
  %s3 = sld [smem:[#allocation0]]
  $region26: #{tpu_custom_call.1} parent=0
    _
  %s5 = ssub.s32 1, %s3
  %s6 = scalar_select 0, %s5, %s3
  $region1: #{tpu_custom_call.1} parent=0
    #allocation2 [shape = 'u8[4096]{0}', space=vmem, size = 0x1000, scoped, tag = 'input window, operand 0, single buffered']
    #allocation3 [shape = 's32[1]{0}', space=sflag, size = 0x4, scoped, tag = 'scoped memory for tpu_custom_call.1']
    #allocation4 [shape = 's32[1]{0}', space=sflag, size = 0x4, scoped, tag = 'scoped memory for tpu_custom_call.1']
    #allocation5 [shape = 'u8[32768]{0}', space=vmem, size = 0x8000, scoped, tag = 'input window, operand 1, single buffered']
    #allocation6 [shape = 's32[1]{0}', space=sflag, size = 0x4, scoped, tag = 'scoped memory for tpu_custom_call.1']
    #allocation7 [shape = 'u8[32768]{0}', space=vmem, size = 0x8000, scoped, tag = 'output window, operand 0, single buffered']
    %7 = vsyncpa [#allocation3], 0
    %8 = vsyncpa [#allocation6], 0
    %9 = vsyncpa [#allocation4], 0
    // Predicated region
    $region2: #{tpu_custom_call.1} parent=1 // pred_check
      _
    $region3: #{tpu_custom_call.1} parent=1 // pred_check_branch
      %11 = sbr.rel (0) target = $region5
    $region4: #{tpu_custom_call.1} parent=1 // pred_region
      %13 = vsyncadd [#allocation3], 0
      %s15 = sshll.u32 %s0, 4
      %s16 = int_to_ptr.hbm [resolvable:$true] %s15
      %s17 = sshll.u32 [#allocation2], 4
      %s18 = int_to_ptr.vmem [resolvable:$true] %s17
      %20 = dma.hbm_to_vmem [thread:$0]  %s16, 128, %s18, [#allocation3]
    $region5: #{tpu_custom_call.1} parent=1 // pred_fallthru
      _
    // Predicated region
    $region6: #{tpu_custom_call.1} parent=1 // pred_check
      _
    $region7: #{tpu_custom_call.1} parent=1 // pred_check_branch
      %22 = sbr.rel (0) target = $region9
    $region8: #{tpu_custom_call.1} parent=1 // pred_region
      %24 = vsyncadd [#allocation6], 0
      %s25 = sshll.u32 %s1, 4
      %s26 = int_to_ptr.hbm [resolvable:$true] %s25
      %s27 = sshll.u32 [#allocation5], 4
      %s28 = int_to_ptr.vmem [resolvable:$true] %s27
      %33 = dma.hbm_to_vmem [thread:$0]  %s26, 1024, %s28, [#allocation6], 128, 128, 8
    $region9: #{tpu_custom_call.1} parent=1 // pred_fallthru
      _
    // Predicated region
    $region10: #{tpu_custom_call.1} parent=1 // pred_check
      _
    $region11: #{tpu_custom_call.1} parent=1 // pred_check_branch
      %35 = sbr.rel (0) target = $region13
    $region12: #{tpu_custom_call.1} parent=1 // pred_region
      %37 = dma.done [#allocation3], 128
    $region13: #{tpu_custom_call.1} parent=1 // pred_fallthru
      _
    // Predicated region
    $region14: #{tpu_custom_call.1} parent=1 // pred_check
      _
    $region15: #{tpu_custom_call.1} parent=1 // pred_check_branch
      %39 = sbr.rel (0) target = $region17
    $region16: #{tpu_custom_call.1} parent=1 // pred_region
      %41 = dma.done [#allocation6], 1024
    $region17: #{tpu_custom_call.1} parent=1 // pred_fallthru
      _
    %v42 = vld [vmem:[#allocation2] sm:$0xff]
    %v43 = vld [vmem:[#allocation5] sm:$0xff]
    %v44 = vld [vmem:[#allocation5 + $0x8] sm:$0xff]
    %v45 = vld [vmem:[#allocation5 + $0x10] sm:$0xff]
    %v46 = vld [vmem:[#allocation5 + $0x18] sm:$0xff]
    %v47 = vld [vmem:[#allocation5 + $0x20] sm:$0xff]
    %v48 = vld [vmem:[#allocation5 + $0x28] sm:$0xff]
    %v49 = vld [vmem:[#allocation5 + $0x30] sm:$0xff]
    %v50 = vld [vmem:[#allocation5 + $0x38] sm:$0xff]
    %v51 = vadd.f32 %v42, %v43
    %v52 = vadd.f32 %v42, %v44
    %v53 = vadd.f32 %v42, %v45
    %v54 = vadd.f32 %v42, %v46
    %v55 = vadd.f32 %v42, %v47
    %v56 = vadd.f32 %v42, %v48
    %v57 = vadd.f32 %v42, %v49
    %v58 = vadd.f32 %v42, %v50
    %67 = vst [vmem:[#allocation1] ss:$2 sm:$0xff] %v51
    %v68 = vld.sshfl [vmem:[#allocation1] sm:$0xff pattern:$0x75316420]
    %v69 = vld.sshfl [vmem:[#allocation1 + $0x8] sm:$0xff pattern:$0x75316420]
    %s70 = scalar_lea.vmem [#allocation1], 16
    %71 = vst [vmem:[%s70] ss:$2 sm:$0xff] %v52
    %v72 = vld.sshfl [vmem:[#allocation1 + $0x10] sm:$0xff pattern:$0x75316420]
    %v73 = vld.sshfl [vmem:[#allocation1 + $0x18] sm:$0xff pattern:$0x75316420]
    %s74 = scalar_lea.vmem [#allocation1], 32
    %75 = vst [vmem:[%s74] ss:$2 sm:$0xff] %v53
    %v76 = vld.sshfl [vmem:[#allocation1 + $0x20] sm:$0xff pattern:$0x75316420]
    %v77 = vld.sshfl [vmem:[#allocation1 + $0x28] sm:$0xff pattern:$0x75316420]
    %s78 = scalar_lea.vmem [#allocation1], 48
    %79 = vst [vmem:[%s78] ss:$2 sm:$0xff] %v54
    %v80 = vld.sshfl [vmem:[#allocation1 + $0x30] sm:$0xff pattern:$0x75316420]
    %v81 = vld.sshfl [vmem:[#allocation1 + $0x38] sm:$0xff pattern:$0x75316420]
    %82 = vst [vmem:[#allocation1] ss:$2 sm:$0xff] %v55
    %v83 = vld.sshfl [vmem:[#allocation1] sm:$0xff pattern:$0x75316420]
    %v84 = vld.sshfl [vmem:[#allocation1 + $0x8] sm:$0xff pattern:$0x75316420]
    %85 = vst [vmem:[%s70] ss:$2 sm:$0xff] %v56
    %v86 = vld.sshfl [vmem:[#allocation1 + $0x10] sm:$0xff pattern:$0x75316420]
    %v87 = vld.sshfl [vmem:[#allocation1 + $0x18] sm:$0xff pattern:$0x75316420]
    %88 = vst [vmem:[%s74] ss:$2 sm:$0xff] %v57
    %v89 = vld.sshfl [vmem:[#allocation1 + $0x20] sm:$0xff pattern:$0x75316420]
    %v90 = vld.sshfl [vmem:[#allocation1 + $0x28] sm:$0xff pattern:$0x75316420]
    %91 = vst [vmem:[%s78] ss:$2 sm:$0xff] %v58
    %v92 = vld.sshfl [vmem:[#allocation1 + $0x30] sm:$0xff pattern:$0x75316420]
    %v93 = vld.sshfl [vmem:[#allocation1 + $0x38] sm:$0xff pattern:$0x75316420]
    %vm110 = vcmask 1043456
    %v111 = vsel %vm110, %v68, -inf
    %v112 = vrot.slane %v111, 4
    %v113 = vmax.f32 %v111, %v112
    %v114 = vrot.slane %v113, 2
    %v115 = vmax.f32 %v113, %v114
    %v116 = vrot.slane %v115, 1
    %v117 = vmax.f32 %v115, %v116
    %v118 = vsel %vm110, %v69, -inf
    %v119 = vrot.slane %v118, 4
    %v120 = vmax.f32 %v118, %v119
    %v121 = vrot.slane %v120, 2
    %v122 = vmax.f32 %v120, %v121
    %v123 = vrot.slane %v122, 1
    %v124 = vmax.f32 %v122, %v123
    %v125 = vsel %vm110, %v72, -inf
    %v126 = vrot.slane %v125, 4
    %v127 = vmax.f32 %v125, %v126
    %v128 = vrot.slane %v127, 2
    %v129 = vmax.f32 %v127, %v128
    %v130 = vrot.slane %v129, 1
    %v131 = vmax.f32 %v129, %v130
    %v132 = vsel %vm110, %v73, -inf
    %v133 = vrot.slane %v132, 4
    %v134 = vmax.f32 %v132, %v133
    %v135 = vrot.slane %v134, 2
    %v136 = vmax.f32 %v134, %v135
    %v137 = vrot.slane %v136, 1
    %v138 = vmax.f32 %v136, %v137
    %v139 = vsel %vm110, %v76, -inf
    %v140 = vrot.slane %v139, 4
    %v141 = vmax.f32 %v139, %v140
    %v142 = vrot.slane %v141, 2
    %v143 = vmax.f32 %v141, %v142
    %v144 = vrot.slane %v143, 1
    %v145 = vmax.f32 %v143, %v144
    %v146 = vsel %vm110, %v77, -inf
    %v147 = vrot.slane %v146, 4
    %v148 = vmax.f32 %v146, %v147
    %v149 = vrot.slane %v148, 2
    %v150 = vmax.f32 %v148, %v149
    %v151 = vrot.slane %v150, 1
    %v152 = vmax.f32 %v150, %v151
    %v153 = vsel %vm110, %v80, -inf
    %v154 = vrot.slane %v153, 4
    %v155 = vmax.f32 %v153, %v154
    %v156 = vrot.slane %v155, 2
    %v157 = vmax.f32 %v155, %v156
    %v158 = vrot.slane %v157, 1
    %v159 = vmax.f32 %v157, %v158
    %v160 = vsel %vm110, %v81, -inf
    %v161 = vrot.slane %v160, 4
    %v162 = vmax.f32 %v160, %v161
    %v163 = vrot.slane %v162, 2
    %v164 = vmax.f32 %v162, %v163
    %v165 = vrot.slane %v164, 1
    %v166 = vmax.f32 %v164, %v165
    %v167 = vsel %vm110, %v83, -inf
    %v168 = vrot.slane %v167, 4
    %v169 = vmax.f32 %v167, %v168
    %v170 = vrot.slane %v169, 2
    %v171 = vmax.f32 %v169, %v170
    %v172 = vrot.slane %v171, 1
    %v173 = vmax.f32 %v171, %v172
    %v174 = vsel %vm110, %v84, -inf
    %v175 = vrot.slane %v174, 4
    %v176 = vmax.f32 %v174, %v175
    %v177 = vrot.slane %v176, 2
    %v178 = vmax.f32 %v176, %v177
    %v179 = vrot.slane %v178, 1
    %v180 = vmax.f32 %v178, %v179
    %v181 = vsel %vm110, %v86, -inf
    %v182 = vrot.slane %v181, 4
    %v183 = vmax.f32 %v181, %v182
    %v184 = vrot.slane %v183, 2
    %v185 = vmax.f32 %v183, %v184
    %v186 = vrot.slane %v185, 1
    %v187 = vmax.f32 %v185, %v186
    %v188 = vsel %vm110, %v87, -inf
    %v189 = vrot.slane %v188, 4
    %v190 = vmax.f32 %v188, %v189
    %v191 = vrot.slane %v190, 2
    %v192 = vmax.f32 %v190, %v191
    %v193 = vrot.slane %v192, 1
    %v194 = vmax.f32 %v192, %v193
    %v195 = vsel %vm110, %v89, -inf
    %v196 = vrot.slane %v195, 4
    %v197 = vmax.f32 %v195, %v196
    %v198 = vrot.slane %v197, 2
    %v199 = vmax.f32 %v197, %v198
    %v200 = vrot.slane %v199, 1
    %v201 = vmax.f32 %v199, %v200
    %v202 = vsel %vm110, %v90, -inf
    %v203 = vrot.slane %v202, 4
    %v204 = vmax.f32 %v202, %v203
    %v205 = vrot.slane %v204, 2
    %v206 = vmax.f32 %v204, %v205
    %v207 = vrot.slane %v206, 1
    %v208 = vmax.f32 %v206, %v207
    %v209 = vsel %vm110, %v92, -inf
    %v210 = vrot.slane %v209, 4
    %v211 = vmax.f32 %v209, %v210
    %v212 = vrot.slane %v211, 2
    %v213 = vmax.f32 %v211, %v212
    %v214 = vrot.slane %v213, 1
    %v215 = vmax.f32 %v213, %v214
    %v216 = vsel %vm110, %v93, -inf
    %v217 = vrot.slane %v216, 4
    %v218 = vmax.f32 %v216, %v217
    %v219 = vrot.slane %v218, 2
    %v220 = vmax.f32 %v218, %v219
    %v221 = vrot.slane %v220, 1
    %v222 = vmax.f32 %v220, %v221
    %v223 = vlaneseq
    %v224 = vshrl.u32 %v223, 7
    %v241 = vrot.slane %v124, 4
    %v242 = vrot.slane %v138, 4
    %v243 = vrot.slane %v152, 4
    %v244 = vrot.slane %v166, 4
    %v245 = vrot.slane %v180, 4
    %v246 = vrot.slane %v194, 4
    %v247 = vrot.slane %v208, 4
    %v248 = vrot.slane %v222, 4
    %v249 = vsel %vm110, %v117, %v241
    %v250 = vsel %vm110, %v131, %v242
    %v251 = vsel %vm110, %v145, %v243
    %v252 = vsel %vm110, %v159, %v244
    %v253 = vsel %vm110, %v173, %v245
    %v254 = vsel %vm110, %v187, %v246
    %v255 = vsel %vm110, %v201, %v247
    %v256 = vsel %vm110, %v215, %v248
    %vm265 = vcmp.ge.f32.partialorder %v51, %v249
    %vm266 = vcmp.ge.f32.partialorder %v52, %v250
    %vm267 = vcmp.ge.f32.partialorder %v53, %v251
    %vm268 = vcmp.ge.f32.partialorder %v54, %v252
    %vm269 = vcmp.ge.f32.partialorder %v55, %v253
    %vm270 = vcmp.ge.f32.partialorder %v56, %v254
    %vm271 = vcmp.ge.f32.partialorder %v57, %v255
    %vm272 = vcmp.ge.f32.partialorder %v58, %v256
    %v274 = vunpack.c.l.s4 839922192
    %v275 = vunpack.c.0.s8 %v274
    %v276 = vperm.slane %v224, %v275
    %v277 = vsel %vm265, %v276, 4
    %v278 = vsel %vm266, %v276, 4
    %v279 = vsel %vm267, %v276, 4
    %v280 = vsel %vm268, %v276, 4
    %v281 = vsel %vm269, %v276, 4
    %v282 = vsel %vm270, %v276, 4
    %v283 = vsel %vm271, %v276, 4
    %v284 = vsel %vm272, %v276, 4
    %285 = vst [vmem:[#allocation1] ss:$2 sm:$0xff] %v277
    %v286 = vld.sshfl [vmem:[#allocation1] sm:$0xff pattern:$0x75316420]
    %v287 = vld.sshfl [vmem:[#allocation1 + $0x8] sm:$0xff pattern:$0x75316420]
    %s288 = scalar_lea.vmem [#allocation1], 16
    %289 = vst [vmem:[%s288] ss:$2 sm:$0xff] %v278
    %v290 = vld.sshfl [vmem:[#allocation1 + $0x10] sm:$0xff pattern:$0x75316420]
    %v291 = vld.sshfl [vmem:[#allocation1 + $0x18] sm:$0xff pattern:$0x75316420]
    %s292 = scalar_lea.vmem [#allocation1], 32
    %293 = vst [vmem:[%s292] ss:$2 sm:$0xff] %v279
    %v294 = vld.sshfl [vmem:[#allocation1 + $0x20] sm:$0xff pattern:$0x75316420]
    %v295 = vld.sshfl [vmem:[#allocation1 + $0x28] sm:$0xff pattern:$0x75316420]
    %s296 = scalar_lea.vmem [#allocation1], 48
    %297 = vst [vmem:[%s296] ss:$2 sm:$0xff] %v280
    %v298 = vld.sshfl [vmem:[#allocation1 + $0x30] sm:$0xff pattern:$0x75316420]
    %v299 = vld.sshfl [vmem:[#allocation1 + $0x38] sm:$0xff pattern:$0x75316420]
    %300 = vst [vmem:[#allocation1] ss:$2 sm:$0xff] %v281
    %v301 = vld.sshfl [vmem:[#allocation1] sm:$0xff pattern:$0x75316420]
    %v302 = vld.sshfl [vmem:[#allocation1 + $0x8] sm:$0xff pattern:$0x75316420]
    %303 = vst [vmem:[%s288] ss:$2 sm:$0xff] %v282
    %v304 = vld.sshfl [vmem:[#allocation1 + $0x10] sm:$0xff pattern:$0x75316420]
    %v305 = vld.sshfl [vmem:[#allocation1 + $0x18] sm:$0xff pattern:$0x75316420]
    %306 = vst [vmem:[%s292] ss:$2 sm:$0xff] %v283
    %v307 = vld.sshfl [vmem:[#allocation1 + $0x20] sm:$0xff pattern:$0x75316420]
    %v308 = vld.sshfl [vmem:[#allocation1 + $0x28] sm:$0xff pattern:$0x75316420]
    %309 = vst [vmem:[%s296] ss:$2 sm:$0xff] %v284
    %v310 = vld.sshfl [vmem:[#allocation1 + $0x30] sm:$0xff pattern:$0x75316420]
    %v311 = vld.sshfl [vmem:[#allocation1 + $0x38] sm:$0xff pattern:$0x75316420]
    %v312 = vsel %vm110, %v286, 2147483647
    %v313 = vrot.slane %v312, 4
    %vm314 = vcmp.lt.s32.totalorder %v312, %v313
    %v315 = vsel %vm314, %v312, %v313
    %v316 = vrot.slane %v315, 2
    %vm317 = vcmp.lt.s32.totalorder %v315, %v316
    %v318 = vsel %vm317, %v315, %v316
    %v319 = vrot.slane %v318, 1
    %vm320 = vcmp.lt.s32.totalorder %v318, %v319
    %v321 = vsel %vm320, %v318, %v319
    %v322 = vsel %vm110, %v287, 2147483647
    %v323 = vrot.slane %v322, 4
    %vm324 = vcmp.lt.s32.totalorder %v322, %v323
    %v325 = vsel %vm324, %v322, %v323
    %v326 = vrot.slane %v325, 2
    %vm327 = vcmp.lt.s32.totalorder %v325, %v326
    %v328 = vsel %vm327, %v325, %v326
    %v329 = vrot.slane %v328, 1
    %vm330 = vcmp.lt.s32.totalorder %v328, %v329
    %v331 = vsel %vm330, %v328, %v329
    %v332 = vsel %vm110, %v290, 2147483647
    %v333 = vrot.slane %v332, 4
    %vm334 = vcmp.lt.s32.totalorder %v332, %v333
    %v335 = vsel %vm334, %v332, %v333
    %v336 = vrot.slane %v335, 2
    %vm337 = vcmp.lt.s32.totalorder %v335, %v336
    %v338 = vsel %vm337, %v335, %v336
    %v339 = vrot.slane %v338, 1
    %vm340 = vcmp.lt.s32.totalorder %v338, %v339
    %v341 = vsel %vm340, %v338, %v339
    %v342 = vsel %vm110, %v291, 2147483647
    %v343 = vrot.slane %v342, 4
    %vm344 = vcmp.lt.s32.totalorder %v342, %v343
    %v345 = vsel %vm344, %v342, %v343
    %v346 = vrot.slane %v345, 2
    %vm347 = vcmp.lt.s32.totalorder %v345, %v346
    %v348 = vsel %vm347, %v345, %v346
    %v349 = vrot.slane %v348, 1
    %vm350 = vcmp.lt.s32.totalorder %v348, %v349
    %v351 = vsel %vm350, %v348, %v349
    %v352 = vsel %vm110, %v294, 2147483647
    %v353 = vrot.slane %v352, 4
    %vm354 = vcmp.lt.s32.totalorder %v352, %v353
    %v355 = vsel %vm354, %v352, %v353
    %v356 = vrot.slane %v355, 2
    %vm357 = vcmp.lt.s32.totalorder %v355, %v356
    %v358 = vsel %vm357, %v355, %v356
    %v359 = vrot.slane %v358, 1
    %vm360 = vcmp.lt.s32.totalorder %v358, %v359
    %v361 = vsel %vm360, %v358, %v359
    %v362 = vsel %vm110, %v295, 2147483647
    %v363 = vrot.slane %v362, 4
    %vm364 = vcmp.lt.s32.totalorder %v362, %v363
    %v365 = vsel %vm364, %v362, %v363
    %v366 = vrot.slane %v365, 2
    %vm367 = vcmp.lt.s32.totalorder %v365, %v366
    %v368 = vsel %vm367, %v365, %v366
    %v369 = vrot.slane %v368, 1
    %vm370 = vcmp.lt.s32.totalorder %v368, %v369
    %v371 = vsel %vm370, %v368, %v369
    %v372 = vsel %vm110, %v298, 2147483647
    %v373 = vrot.slane %v372, 4
    %vm374 = vcmp.lt.s32.totalorder %v372, %v373
    %v375 = vsel %vm374, %v372, %v373
    %v376 = vrot.slane %v375, 2
    %vm377 = vcmp.lt.s32.totalorder %v375, %v376
    %v378 = vsel %vm377, %v375, %v376
    %v379 = vrot.slane %v378, 1
    %vm380 = vcmp.lt.s32.totalorder %v378, %v379
    %v381 = vsel %vm380, %v378, %v379
    %v382 = vsel %vm110, %v299, 2147483647
    %v383 = vrot.slane %v382, 4
    %vm384 = vcmp.lt.s32.totalorder %v382, %v383
    %v385 = vsel %vm384, %v382, %v383
    %v386 = vrot.slane %v385, 2
    %vm387 = vcmp.lt.s32.totalorder %v385, %v386
    %v388 = vsel %vm387, %v385, %v386
    %v389 = vrot.slane %v388, 1
    %vm390 = vcmp.lt.s32.totalorder %v388, %v389
    %v391 = vsel %vm390, %v388, %v389
    %v392 = vsel %vm110, %v301, 2147483647
    %v393 = vrot.slane %v392, 4
    %vm394 = vcmp.lt.s32.totalorder %v392, %v393
    %v395 = vsel %vm394, %v392, %v393
    %v396 = vrot.slane %v395, 2
    %vm397 = vcmp.lt.s32.totalorder %v395, %v396
    %v398 = vsel %vm397, %v395, %v396
    %v399 = vrot.slane %v398, 1
    %vm400 = vcmp.lt.s32.totalorder %v398, %v399
    %v401 = vsel %vm400, %v398, %v399
    %v402 = vsel %vm110, %v302, 2147483647
    %v403 = vrot.slane %v402, 4
    %vm404 = vcmp.lt.s32.totalorder %v402, %v403
    %v405 = vsel %vm404, %v402, %v403
    %v406 = vrot.slane %v405, 2
    %vm407 = vcmp.lt.s32.totalorder %v405, %v406
    %v408 = vsel %vm407, %v405, %v406
    %v409 = vrot.slane %v408, 1
    %vm410 = vcmp.lt.s32.totalorder %v408, %v409
    %v411 = vsel %vm410, %v408, %v409
    %v412 = vsel %vm110, %v304, 2147483647
    %v413 = vrot.slane %v412, 4
    %vm414 = vcmp.lt.s32.totalorder %v412, %v413
    %v415 = vsel %vm414, %v412, %v413
    %v416 = vrot.slane %v415, 2
    %vm417 = vcmp.lt.s32.totalorder %v415, %v416
    %v418 = vsel %vm417, %v415, %v416
    %v419 = vrot.slane %v418, 1
    %vm420 = vcmp.lt.s32.totalorder %v418, %v419
    %v421 = vsel %vm420, %v418, %v419
    %v422 = vsel %vm110, %v305, 2147483647
    %v423 = vrot.slane %v422, 4
    %vm424 = vcmp.lt.s32.totalorder %v422, %v423
    %v425 = vsel %vm424, %v422, %v423
    %v426 = vrot.slane %v425, 2
    %vm427 = vcmp.lt.s32.totalorder %v425, %v426
    %v428 = vsel %vm427, %v425, %v426
    %v429 = vrot.slane %v428, 1
    %vm430 = vcmp.lt.s32.totalorder %v428, %v429
    %v431 = vsel %vm430, %v428, %v429
    %v432 = vsel %vm110, %v307, 2147483647
    %v433 = vrot.slane %v432, 4
    %vm434 = vcmp.lt.s32.totalorder %v432, %v433
    %v435 = vsel %vm434, %v432, %v433
    %v436 = vrot.slane %v435, 2
    %vm437 = vcmp.lt.s32.totalorder %v435, %v436
    %v438 = vsel %vm437, %v435, %v436
    %v439 = vrot.slane %v438, 1
    %vm440 = vcmp.lt.s32.totalorder %v438, %v439
    %v441 = vsel %vm440, %v438, %v439
    %v442 = vsel %vm110, %v308, 2147483647
    %v443 = vrot.slane %v442, 4
    %vm444 = vcmp.lt.s32.totalorder %v442, %v443
    %v445 = vsel %vm444, %v442, %v443
    %v446 = vrot.slane %v445, 2
    %vm447 = vcmp.lt.s32.totalorder %v445, %v446
    %v448 = vsel %vm447, %v445, %v446
    %v449 = vrot.slane %v448, 1
    %vm450 = vcmp.lt.s32.totalorder %v448, %v449
    %v451 = vsel %vm450, %v448, %v449
    %v452 = vsel %vm110, %v310, 2147483647
    %v453 = vrot.slane %v452, 4
    %vm454 = vcmp.lt.s32.totalorder %v452, %v453
    %v455 = vsel %vm454, %v452, %v453
    %v456 = vrot.slane %v455, 2
    %vm457 = vcmp.lt.s32.totalorder %v455, %v456
    %v458 = vsel %vm457, %v455, %v456
    %v459 = vrot.slane %v458, 1
    %vm460 = vcmp.lt.s32.totalorder %v458, %v459
    %v461 = vsel %vm460, %v458, %v459
    %v462 = vsel %vm110, %v311, 2147483647
    %v463 = vrot.slane %v462, 4
    %vm464 = vcmp.lt.s32.totalorder %v462, %v463
    %v465 = vsel %vm464, %v462, %v463
    %v466 = vrot.slane %v465, 2
    %vm467 = vcmp.lt.s32.totalorder %v465, %v466
    %v468 = vsel %vm467, %v465, %v466
    %v469 = vrot.slane %v468, 1
    %vm470 = vcmp.lt.s32.totalorder %v468, %v469
    %v471 = vsel %vm470, %v468, %v469
    %vm472 = vcmp.eq.s32.totalorder %v224, %v321
    %vm473 = vcmp.eq.s32.totalorder %v224, %v331
    %vm474 = vcmp.eq.s32.totalorder %v224, %v341
    %vm475 = vcmp.eq.s32.totalorder %v224, %v351
    %vm476 = vcmp.eq.s32.totalorder %v224, %v361
    %vm477 = vcmp.eq.s32.totalorder %v224, %v371
    %vm478 = vcmp.eq.s32.totalorder %v224, %v381
    %vm479 = vcmp.eq.s32.totalorder %v224, %v391
    %vm480 = vcmp.eq.s32.totalorder %v224, %v401
    %vm481 = vcmp.eq.s32.totalorder %v224, %v411
    %vm482 = vcmp.eq.s32.totalorder %v224, %v421
    %vm483 = vcmp.eq.s32.totalorder %v224, %v431
    %vm484 = vcmp.eq.s32.totalorder %v224, %v441
    %vm485 = vcmp.eq.s32.totalorder %v224, %v451
    %vm486 = vcmp.eq.s32.totalorder %v224, %v461
    %vm487 = vcmp.eq.s32.totalorder %v224, %v471
    %v488 = vsel %vm472, 1, 0
    %v489 = vsel %vm473, 1, 0
    %v490 = vsel %vm474, 1, 0
    %v491 = vsel %vm475, 1, 0
    %v492 = vsel %vm476, 1, 0
    %v493 = vsel %vm477, 1, 0
    %v494 = vsel %vm478, 1, 0
    %v495 = vsel %vm479, 1, 0
    %v496 = vsel %vm480, 1, 0
    %v497 = vsel %vm481, 1, 0
    %v498 = vsel %vm482, 1, 0
    %v499 = vsel %vm483, 1, 0
    %v500 = vsel %vm484, 1, 0
    %v501 = vsel %vm485, 1, 0
    %v502 = vsel %vm486, 1, 0
    %v503 = vsel %vm487, 1, 0
    %v504 = vcvt.s32.f32 %v488
    %v505 = vcvt.s32.f32 %v489
    %v506 = vcvt.s32.f32 %v490
    %v507 = vcvt.s32.f32 %v491
    %v508 = vcvt.s32.f32 %v492
    %v509 = vcvt.s32.f32 %v493
    %v510 = vcvt.s32.f32 %v494
    %v511 = vcvt.s32.f32 %v495
    %v512 = vcvt.s32.f32 %v496
    %v513 = vcvt.s32.f32 %v497
    %v514 = vcvt.s32.f32 %v498
    %v515 = vcvt.s32.f32 %v499
    %v516 = vcvt.s32.f32 %v500
    %v517 = vcvt.s32.f32 %v501
    %v518 = vcvt.s32.f32 %v502
    %v519 = vcvt.s32.f32 %v503
    %v536 = vrot.slane %v505, 4
    %v537 = vrot.slane %v507, 4
    %v538 = vrot.slane %v509, 4
    %v539 = vrot.slane %v511, 4
    %v540 = vrot.slane %v513, 4
    %v541 = vrot.slane %v515, 4
    %v542 = vrot.slane %v517, 4
    %v543 = vrot.slane %v519, 4
    %v544 = vsel %vm110, %v504, %v536
    %v545 = vsel %vm110, %v506, %v537
    %v546 = vsel %vm110, %v508, %v538
    %v547 = vsel %vm110, %v510, %v539
    %v548 = vsel %vm110, %v512, %v540
    %v549 = vsel %vm110, %v514, %v541
    %v550 = vsel %vm110, %v516, %v542
    %v551 = vsel %vm110, %v518, %v543
    %560 = vst [vmem:[#allocation7] sm:$0xff] %v544
    %561 = vst [vmem:[#allocation7 + $0x8] sm:$0xff] %v545
    %562 = vst [vmem:[#allocation7 + $0x10] sm:$0xff] %v546
    %563 = vst [vmem:[#allocation7 + $0x18] sm:$0xff] %v547
    %564 = vst [vmem:[#allocation7 + $0x20] sm:$0xff] %v548
    %565 = vst [vmem:[#allocation7 + $0x28] sm:$0xff] %v549
    %566 = vst [vmem:[#allocation7 + $0x30] sm:$0xff] %v550
    %567 = vst [vmem:[#allocation7 + $0x38] sm:$0xff] %v551
    // Predicated region
    $region18: #{tpu_custom_call.1} parent=1 // pred_check
      _
    $region19: #{tpu_custom_call.1} parent=1 // pred_check_branch
      %569 = sbr.rel (0) target = $region21
    $region20: #{tpu_custom_call.1} parent=1 // pred_region
      %571 = vsyncadd [#allocation4], 0
      %s572 = sshll.u32 [#allocation7], 4
      %s573 = int_to_ptr.vmem [resolvable:$true] %s572
      %s574 = sshll.u32 %s2, 4
      %s575 = int_to_ptr.hbm [resolvable:$true] %s574
      %580 = dma.vmem_to_hbm [thread:$0]  %s573, 1024, %s575, [#allocation4], 128, 128, 8
    $region21: #{tpu_custom_call.1} parent=1 // pred_fallthru
      _
    // Predicated region
    $region22: #{tpu_custom_call.1} parent=1 // pred_check
      _
    $region23: #{tpu_custom_call.1} parent=1 // pred_check_branch
      %582 = sbr.rel (0) target = $region25
    $region24: #{tpu_custom_call.1} parent=1 // pred_region
      %584 = dma.done [#allocation4], 1024
    $region25: #{tpu_custom_call.1} parent=1 // pred_fallthru
      _
    %585 = vsyncpa [#allocation3], 1
    %586 = vsyncpa [#allocation6], 1
    %587 = vsyncpa [#allocation4], 1

</llo_original>
